<compile_context>
chip_gen: v7x
topology: tpu7x:2x2x1
jax: 0.10.0
libtpu: 0.0.40
codegen_flags: <defaults>
</compile_context>

<pallas_src>
import functools

import jax
import jax.numpy as jnp
from jax.experimental import pallas as pl

# ---- SMART hyperparameters (module defaults) --------------------------------
NUM_STEPS = 1
STEP_SIZE = 1e-3
EPSILON = 1e-6
NOISE_VAR = 1e-5

# ---- problem sizes (small, but lane-dense: H and C are multiples of 128) ----
N = 64     # batch rows (single tile; entire problem stays VMEM-resident)
H = 128    # hidden (embedding) dim
C = 128    # number of classes


def smart_loss_kernel(noise_ref, state_ref, w_ref, wt_ref, out_ref, *,
                      inv_n, power_dtype):
    noise = noise_ref[...]            # (N, H) f32
    state = state_ref[...]            # (N, C) f32 -- clean logits (detached)

    # Target distribution q = softmax(state).  Exact divide: q feeds the final
    # loss and must stay consistent with the exact log(sum_q) used for logq.
    s_q = state - jnp.max(state, axis=-1, keepdims=True)
    e_q = jnp.exp(s_q)
    sum_q = jnp.sum(e_q, axis=-1, keepdims=True)
    logq = s_q - jnp.log(sum_q)
    q = e_q / sum_q

    # ---- adversarial power-iteration steps (unrolled; NUM_STEPS static) -----
    # Weight refs are read at the dot sites (not hoisted) to relieve vreg
    # pressure.  Matmul operands are cast to `power_dtype` (bf16 on v6e/v7x);
    # the direction is renormalized by the inf-norm projection, so this is
    # accuracy-free.
    for _ in range(NUM_STEPS):
        # z = model(embed + noise) = state + noise @ W   (state = embed@W + b)
        z = state + jnp.dot(noise.astype(power_dtype),
                            w_ref[...].astype(power_dtype),
                            preferred_element_type=jnp.float32)
        s_z = z - jnp.max(z, axis=-1, keepdims=True)
        e_z = jnp.exp(s_z)
        p = e_z * pl.reciprocal(jnp.sum(e_z, axis=-1, keepdims=True),
                                approx=True)
        # d(batchmean KL)/dz = (p - q)/N ;  d/dnoise = (.) @ W^T
        grad_noise = jnp.dot(((p - q) * inv_n).astype(power_dtype),
                             wt_ref[...].astype(power_dtype),
                             preferred_element_type=jnp.float32)
        step = noise + STEP_SIZE * grad_noise
        # inf_norm projection: max |.| over the last dim, keepdim.
        step_norm = jnp.max(jnp.abs(step), axis=-1, keepdims=True)
        noise = step * pl.reciprocal(step_norm + EPSILON, approx=True)

    # ---- i == num_steps: loss_last_fn(model(embed + noise), state), all f32 -
    z_f = state + jnp.dot(noise, w_ref[...], preferred_element_type=jnp.float32)
    s_f = z_f - jnp.max(z_f, axis=-1, keepdims=True)
    logp_f = s_f - jnp.log(jnp.sum(jnp.exp(s_f), axis=-1, keepdims=True))
    per_row = jnp.sum(q * (logq - logp_f), axis=-1, keepdims=True)   # (N, 1)
    total = jnp.sum(per_row, axis=0, keepdims=True) * inv_n          # (1, 1)
    # Lane-dense, unmasked store; element [0, 0] is the finished scalar loss.
    out_ref[...] = jnp.broadcast_to(total, out_ref.shape).astype(out_ref.dtype)


def _power_iteration_dtype():
    """bf16 matmul path on bf16-native chips (v6e/v7x); f32 on v5e & older."""
    try:
        kind = jax.devices()[0].device_kind.lower()
    except Exception:
        return jnp.float32
    return jnp.bfloat16 if ("v6" in kind or "v7" in kind) else jnp.float32


@functools.partial(jax.jit, static_argnames="power_dtype")
def smart_loss(embed, noise, state, w, b, power_dtype=jnp.float32):
    """Scalar SMART loss.

    Exploits the linear-model identity state == embed @ w + b, so `embed`
    and `b` are already folded into `state` and never re-read in the kernel.
    """
    del embed, b  # folded into `state` by linearity of the instantiated model
    n_rows = noise.shape[0]
    wt = w.T  # constant; transposed once on the host (no in-kernel XLU work)

    # Whole problem in one VMEM-resident invocation: no grid, no pipeline
    # overhead, no per-tile partials + host-side reduce.
    # TODO(synk): for model-sized H/C, stream W / W^T with a K/N-tiled grid
    # (resident f32 weights stop fitting v7x's 64 MiB VMEM around H=C=2048).
    out = pl.pallas_call(
        functools.partial(smart_loss_kernel, inv_n=1.0 / n_rows,
                          power_dtype=power_dtype),
        out_shape=jax.ShapeDtypeStruct((8, 128), jnp.float32),
    )(noise, state, w, wt)
    return out[0, 0]


# ---- pure-JAX reference (uses jax.grad, mirrors the torch autograd path) ----
def smart_loss_ref(embed, noise, state, w, b):
    def model(x):
        return x @ w + b

    logq = jax.nn.log_softmax(state, axis=-1)   # state.detach()
    q = jnp.exp(logq)

    def kl(logits):
        logp = jax.nn.log_softmax(logits, axis=-1)
        return jnp.sum(q * (logq - logp)) / logits.shape[0]   # batchmean

    for _ in range(NUM_STEPS):
        g = jax.grad(lambda n_: kl(model(embed + n_)))(noise)
        step = noise + STEP_SIZE * g
        step_norm = jnp.max(jnp.abs(step), axis=-1, keepdims=True)
        noise = step / (step_norm + EPSILON)

    return kl(model(embed + noise))


if __name__ == "__main__":
    key = jax.random.PRNGKey(0)
    k_embed, k_w, k_b, k_noise = jax.random.split(key, 4)

    embed = jax.random.normal(k_embed, (N, H), dtype=jnp.float32)
    w = jax.random.normal(k_w, (H, C), dtype=jnp.float32) * 0.1
    b = jax.random.normal(k_b, (C,), dtype=jnp.float32) * 0.01

    # Clean forward pass of the "model" (glue, plain JAX).
    state = embed @ w + b                                            # (N, C)

    # noise = randn_like(embed) * noise_var  (deterministic, host-side)
    noise = jax.random.normal(k_noise, (N, H), dtype=jnp.float32) * NOISE_VAR

    out = jax.block_until_ready(
        smart_loss(embed, noise, state, w, b,
                   power_dtype=_power_iteration_dtype()))
    ref = jax.block_until_ready(smart_loss_ref(embed, noise, state, w, b))

    # approx reciprocals inside the power-iteration step (+ bf16 matmuls on
    # v6e/v7x) -> slightly relaxed tolerance vs the f32 autograd reference.
    assert jnp.allclose(out, ref, rtol=1e-2, atol=1e-5), (out, ref)

    print("KERNEL_OK")
</pallas_src>

<mosaic_0001>
module attributes {stable_mosaic.version = 11 : i64} {
  func.func @smart_loss_kernel(%arg0: memref<64x128xf32, #tpu.memory_space<vmem>>, %arg1: memref<64x128xf32, #tpu.memory_space<vmem>>, %arg2: memref<128x128xf32, #tpu.memory_space<vmem>>, %arg3: memref<128x128xf32, #tpu.memory_space<vmem>>, %arg4: memref<8x128xf32, #tpu.memory_space<vmem>>) attributes {dimension_semantics = [], scalar_prefetch = 0 : i64, scratch_operands = 0 : i64, tpu.core_type = #tpu.core_type<tc>} {
    %c0 = arith.constant 0 : index
    %c0_0 = arith.constant 0 : index
    %0 = vector.load %arg0[%c0, %c0_0] : memref<64x128xf32, #tpu.memory_space<vmem>>, vector<64x128xf32>
    %c0_1 = arith.constant 0 : index
    %c0_2 = arith.constant 0 : index
    %1 = vector.load %arg1[%c0_1, %c0_2] : memref<64x128xf32, #tpu.memory_space<vmem>>, vector<64x128xf32>
    %cst = arith.constant dense<0xFF800000> : vector<64xf32>
    %2 = vector.multi_reduction <maximumf>, %1, %cst [1] : vector<64x128xf32> to vector<64xf32>
    %3 = vector.shape_cast %2 : vector<64xf32> to vector<64x1xf32>
    %4 = vector.broadcast %3 : vector<64x1xf32> to vector<64x128xf32>
    %5 = arith.subf %1, %4 : vector<64x128xf32>
    %6 = math.exp %5 : vector<64x128xf32>
    %cst_3 = arith.constant dense<0.000000e+00> : vector<64xf32>
    %7 = vector.multi_reduction <add>, %6, %cst_3 [1] : vector<64x128xf32> to vector<64xf32>
    %8 = vector.shape_cast %7 : vector<64xf32> to vector<64x1xf32>
    %9 = math.log %8 : vector<64x1xf32>
    %10 = vector.broadcast %9 : vector<64x1xf32> to vector<64x128xf32>
    %11 = arith.subf %5, %10 : vector<64x128xf32>
    %12 = vector.broadcast %8 : vector<64x1xf32> to vector<64x128xf32>
    %13 = arith.divf %6, %12 : vector<64x128xf32>
    %c0_4 = arith.constant 0 : index
    %c0_5 = arith.constant 0 : index
    %14 = vector.load %arg2[%c0_4, %c0_5] : memref<128x128xf32, #tpu.memory_space<vmem>>, vector<128x128xf32>
    %cst_6 = arith.constant dense<0.000000e+00> : vector<64x128xf32>
    %15 = tpu.matmul %0, %14, %cst_6 {dimension_numbers = #tpu.dot_dimension_numbers<[1], [0], [0], [1], [0, 0, 1, 1], [], []>} : vector<64x128xf32>, vector<128x128xf32>, vector<64x128xf32> -> vector<64x128xf32>
    %16 = arith.addf %1, %15 : vector<64x128xf32>
    %cst_7 = arith.constant dense<0xFF800000> : vector<64xf32>
    %17 = vector.multi_reduction <maximumf>, %16, %cst_7 [1] : vector<64x128xf32> to vector<64xf32>
    %18 = vector.shape_cast %17 : vector<64xf32> to vector<64x1xf32>
    %19 = vector.broadcast %18 : vector<64x1xf32> to vector<64x128xf32>
    %20 = arith.subf %16, %19 : vector<64x128xf32>
    %21 = math.exp %20 : vector<64x128xf32>
    %cst_8 = arith.constant dense<0.000000e+00> : vector<64xf32>
    %22 = vector.multi_reduction <add>, %21, %cst_8 [1] : vector<64x128xf32> to vector<64xf32>
    %23 = vector.shape_cast %22 : vector<64xf32> to vector<64x1xf32>
    %24 = tpu.reciprocal %23 {approx = true} : vector<64x1xf32> -> vector<64x1xf32>
    %25 = vector.broadcast %24 : vector<64x1xf32> to vector<64x128xf32>
    %26 = arith.mulf %21, %25 : vector<64x128xf32>
    %27 = arith.subf %26, %13 : vector<64x128xf32>
    %cst_9 = arith.constant 1.562500e-02 : f32
    %28 = vector.broadcast %cst_9 : f32 to vector<64x128xf32>
    %29 = arith.mulf %27, %28 : vector<64x128xf32>
    %c0_10 = arith.constant 0 : index
    %c0_11 = arith.constant 0 : index
    %30 = vector.load %arg3[%c0_10, %c0_11] : memref<128x128xf32, #tpu.memory_space<vmem>>, vector<128x128xf32>
    %cst_12 = arith.constant dense<0.000000e+00> : vector<64x128xf32>
    %31 = tpu.matmul %29, %30, %cst_12 {dimension_numbers = #tpu.dot_dimension_numbers<[1], [0], [0], [1], [0, 0, 1, 1], [], []>} : vector<64x128xf32>, vector<128x128xf32>, vector<64x128xf32> -> vector<64x128xf32>
    %cst_13 = arith.constant 1.000000e-03 : f32
    %32 = vector.broadcast %cst_13 : f32 to vector<64x128xf32>
    %33 = arith.mulf %32, %31 : vector<64x128xf32>
    %34 = arith.addf %0, %33 : vector<64x128xf32>
    %35 = math.absf %34 : vector<64x128xf32>
    %cst_14 = arith.constant dense<0xFF800000> : vector<64xf32>
    %36 = vector.multi_reduction <maximumf>, %35, %cst_14 [1] : vector<64x128xf32> to vector<64xf32>
    %37 = vector.shape_cast %36 : vector<64xf32> to vector<64x1xf32>
    %cst_15 = arith.constant 9.99999997E-7 : f32
    %38 = vector.broadcast %cst_15 : f32 to vector<64x1xf32>
    %39 = arith.addf %37, %38 : vector<64x1xf32>
    %40 = tpu.reciprocal %39 {approx = true} : vector<64x1xf32> -> vector<64x1xf32>
    %41 = vector.broadcast %40 : vector<64x1xf32> to vector<64x128xf32>
    %42 = arith.mulf %34, %41 : vector<64x128xf32>
    %c0_16 = arith.constant 0 : index
    %c0_17 = arith.constant 0 : index
    %43 = vector.load %arg2[%c0_16, %c0_17] : memref<128x128xf32, #tpu.memory_space<vmem>>, vector<128x128xf32>
    %cst_18 = arith.constant dense<0.000000e+00> : vector<64x128xf32>
    %44 = tpu.matmul %42, %43, %cst_18 {dimension_numbers = #tpu.dot_dimension_numbers<[1], [0], [0], [1], [0, 0, 1, 1], [], []>} : vector<64x128xf32>, vector<128x128xf32>, vector<64x128xf32> -> vector<64x128xf32>
    %45 = arith.addf %1, %44 : vector<64x128xf32>
    %cst_19 = arith.constant dense<0xFF800000> : vector<64xf32>
    %46 = vector.multi_reduction <maximumf>, %45, %cst_19 [1] : vector<64x128xf32> to vector<64xf32>
    %47 = vector.shape_cast %46 : vector<64xf32> to vector<64x1xf32>
    %48 = vector.broadcast %47 : vector<64x1xf32> to vector<64x128xf32>
    %49 = arith.subf %45, %48 : vector<64x128xf32>
    %50 = math.exp %49 : vector<64x128xf32>
    %cst_20 = arith.constant dense<0.000000e+00> : vector<64xf32>
    %51 = vector.multi_reduction <add>, %50, %cst_20 [1] : vector<64x128xf32> to vector<64xf32>
    %52 = vector.shape_cast %51 : vector<64xf32> to vector<64x1xf32>
    %53 = math.log %52 : vector<64x1xf32>
    %54 = vector.broadcast %53 : vector<64x1xf32> to vector<64x128xf32>
    %55 = arith.subf %49, %54 : vector<64x128xf32>
    %56 = arith.subf %11, %55 : vector<64x128xf32>
    %57 = arith.mulf %13, %56 : vector<64x128xf32>
    %cst_21 = arith.constant dense<0.000000e+00> : vector<64xf32>
    %58 = vector.multi_reduction <add>, %57, %cst_21 [1] : vector<64x128xf32> to vector<64xf32>
    %59 = vector.shape_cast %58 : vector<64xf32> to vector<64x1xf32>
    %cst_22 = arith.constant dense<0.000000e+00> : vector<1xf32>
    %60 = vector.multi_reduction <add>, %59, %cst_22 [0] : vector<64x1xf32> to vector<1xf32>
    %61 = vector.shape_cast %60 : vector<1xf32> to vector<1x1xf32>
    %cst_23 = arith.constant 1.562500e-02 : f32
    %62 = vector.broadcast %cst_23 : f32 to vector<1x1xf32>
    %63 = arith.mulf %61, %62 : vector<1x1xf32>
    %64 = vector.shape_cast %63 : vector<1x1xf32> to vector<1x1xf32>
    %65 = vector.broadcast %64 : vector<1x1xf32> to vector<8x128xf32>
    %c0_24 = arith.constant 0 : index
    %c0_25 = arith.constant 0 : index
    %66 = vector.load %arg4[%c0_24, %c0_25] : memref<8x128xf32, #tpu.memory_space<vmem>>, vector<8x128xf32>
    tpu.vector_store %arg4[%c0_24, %c0_25], %65 {strides = array<i32>} : memref<8x128xf32, #tpu.memory_space<vmem>>, vector<8x128xf32>,
    return
  }
}

</mosaic_0001>

<llo_original>
// kernel: smart_loss.1
$region0: #{smart_loss.1}
  #allocation0 [shape = 'u32[]', space=smem, size = 0x4, offset = 0x4, fixed_abs, tag = 'smem constant byte address 0x4 - core index']
  #allocation1 [shape = 'u32[144,128]{1,0:T(1,128)}', space=vmem, size = 0x12000, scoped, tag = 'internal scratch']
  %s0 = inlined_call_operand.vmem [shape: f32[64,128], index: 0, kind: input, shape index: {}]
  %s1 = inlined_call_operand.vmem [shape: f32[64,128], index: 1, kind: input, shape index: {}]
  %s2 = inlined_call_operand.vmem [shape: f32[128,128], index: 2, kind: input, shape index: {}]
  %s3 = inlined_call_operand.vmem [shape: f32[128,128], index: 3, kind: input, shape index: {}]
  %s4 = inlined_call_operand.vmem [shape: f32[8,128], index: 4, kind: output, shape index: {}]
  %s5 = sld [smem:[#allocation0]]
  $region26: #{smart_loss.1} parent=0
    _
  %s7 = ssub.s32 1, %s5
  %s8 = scalar_select 0, %s7, %s5
  // Predicated region
  $region2: #{smart_loss.1} parent=0 // pred_check
    _
  $region3: #{smart_loss.1} parent=0 // pred_check_branch
    %10 = sbr.rel (0) target = $region5
  $region4: #{smart_loss.1} parent=0 // pred_region
    _
  $region5: #{smart_loss.1} parent=0 // pred_fallthru
    _
  // Predicated region
  $region6: #{smart_loss.1} parent=0 // pred_check
    _
  $region7: #{smart_loss.1} parent=0 // pred_check_branch
    %12 = sbr.rel (0) target = $region9
  $region8: #{smart_loss.1} parent=0 // pred_region
    _
  $region9: #{smart_loss.1} parent=0 // pred_fallthru
    _
  // Predicated region
  $region10: #{smart_loss.1} parent=0 // pred_check
    _
  $region11: #{smart_loss.1} parent=0 // pred_check_branch
    %14 = sbr.rel (0) target = $region13
  $region12: #{smart_loss.1} parent=0 // pred_region
    _
  $region13: #{smart_loss.1} parent=0 // pred_fallthru
    _
  // Predicated region
  $region14: #{smart_loss.1} parent=0 // pred_check
    _
  $region15: #{smart_loss.1} parent=0 // pred_check_branch
    %16 = sbr.rel (0) target = $region17
  $region16: #{smart_loss.1} parent=0 // pred_region
    _
  $region17: #{smart_loss.1} parent=0 // pred_fallthru
    _
  %v17 = vld [vmem:[%s0] sm:$0xff]
  %v18 = vld [vmem:[%s0 + $0x8] sm:$0xff]
  %v19 = vld [vmem:[%s0 + $0x10] sm:$0xff]
  %v20 = vld [vmem:[%s0 + $0x18] sm:$0xff]
  %v21 = vld [vmem:[%s0 + $0x20] sm:$0xff]
  %v22 = vld [vmem:[%s0 + $0x28] sm:$0xff]
  %v23 = vld [vmem:[%s0 + $0x30] sm:$0xff]
  %v24 = vld [vmem:[%s0 + $0x38] sm:$0xff]
  %v25 = vld [vmem:[%s1] sm:$0xff]
  %v26 = vld [vmem:[%s1 + $0x8] sm:$0xff]
  %v27 = vld [vmem:[%s1 + $0x10] sm:$0xff]
  %v28 = vld [vmem:[%s1 + $0x18] sm:$0xff]
  %v29 = vld [vmem:[%s1 + $0x20] sm:$0xff]
  %v30 = vld [vmem:[%s1 + $0x28] sm:$0xff]
  %v31 = vld [vmem:[%s1 + $0x30] sm:$0xff]
  %v32 = vld [vmem:[%s1 + $0x38] sm:$0xff]
  %33 = vmax.xlane.f32.xlu0 %v25
  %v34 = vpop.xlane.xlu0 %33
  %35 = vmax.xlane.f32.xlu0 %v26
  %v36 = vpop.xlane.xlu0 %35
  %37 = vmax.xlane.f32.xlu0 %v27
  %v38 = vpop.xlane.xlu0 %37
  %39 = vmax.xlane.f32.xlu0 %v28
  %v40 = vpop.xlane.xlu0 %39
  %41 = vmax.xlane.f32.xlu0 %v29
  %v42 = vpop.xlane.xlu0 %41
  %43 = vmax.xlane.f32.xlu0 %v30
  %v44 = vpop.xlane.xlu0 %43
  %45 = vmax.xlane.f32.xlu0 %v31
  %v46 = vpop.xlane.xlu0 %45
  %47 = vmax.xlane.f32.xlu0 %v32
  %v48 = vpop.xlane.xlu0 %47
  %v49 = vsub.f32 %v25, %v34
  %v50 = vsub.f32 %v26, %v36
  %v51 = vsub.f32 %v27, %v38
  %v52 = vsub.f32 %v28, %v40
  %v53 = vsub.f32 %v29, %v42
  %v54 = vsub.f32 %v30, %v44
  %v55 = vsub.f32 %v31, %v46
  %v56 = vsub.f32 %v32, %v48
  %v57 = vmul.f32 %v49, 1.442695
  %v58 = vpow.pop %v57
  %v59 = vmul.f32 %v50, 1.442695
  %v60 = vpow.pop %v59
  %v61 = vmul.f32 %v51, 1.442695
  %v62 = vpow.pop %v61
  %v63 = vmul.f32 %v52, 1.442695
  %v64 = vpow.pop %v63
  %v65 = vmul.f32 %v53, 1.442695
  %v66 = vpow.pop %v65
  %v67 = vmul.f32 %v54, 1.442695
  %v68 = vpow.pop %v67
  %v69 = vmul.f32 %v55, 1.442695
  %v70 = vpow.pop %v69
  %v71 = vmul.f32 %v56, 1.442695
  %v72 = vpow.pop %v71
  %73 = vadd.xlane.f32.xlu0 %v58
  %v74 = vpop.xlane.xlu0 %73
  %75 = vadd.xlane.f32.xlu0 %v60
  %v76 = vpop.xlane.xlu0 %75
  %77 = vadd.xlane.f32.xlu0 %v62
  %v78 = vpop.xlane.xlu0 %77
  %79 = vadd.xlane.f32.xlu0 %v64
  %v80 = vpop.xlane.xlu0 %79
  %81 = vadd.xlane.f32.xlu0 %v66
  %v82 = vpop.xlane.xlu0 %81
  %83 = vadd.xlane.f32.xlu0 %v68
  %v84 = vpop.xlane.xlu0 %83
  %85 = vadd.xlane.f32.xlu0 %v70
  %v86 = vpop.xlane.xlu0 %85
  %87 = vadd.xlane.f32.xlu0 %v72
  %v88 = vpop.xlane.xlu0 %87
  %v89 = vlog2.pop %v74
  %v90 = vmul.f32 %v89, 0.6931472
  %v91 = vlog2.pop %v76
  %v92 = vmul.f32 %v91, 0.6931472
  %v93 = vlog2.pop %v78
  %v94 = vmul.f32 %v93, 0.6931472
  %v95 = vlog2.pop %v80
  %v96 = vmul.f32 %v95, 0.6931472
  %v97 = vlog2.pop %v82
  %v98 = vmul.f32 %v97, 0.6931472
  %v99 = vlog2.pop %v84
  %v100 = vmul.f32 %v99, 0.6931472
  %v101 = vlog2.pop %v86
  %v102 = vmul.f32 %v101, 0.6931472
  %v103 = vlog2.pop %v88
  %v104 = vmul.f32 %v103, 0.6931472
  %v105 = vsub.f32 %v49, %v90
  %v106 = vsub.f32 %v50, %v92
  %v107 = vsub.f32 %v51, %v94
  %v108 = vsub.f32 %v52, %v96
  %v109 = vsub.f32 %v53, %v98
  %v110 = vsub.f32 %v54, %v100
  %v111 = vsub.f32 %v55, %v102
  %v112 = vsub.f32 %v56, %v104
  %v113 = vrcp.pop %v74
  %v114 = vmul.f32 %v58, %v113
  %v115 = vrcp.pop %v76
  %v116 = vmul.f32 %v60, %v115
  %v117 = vrcp.pop %v78
  %v118 = vmul.f32 %v62, %v117
  %v119 = vrcp.pop %v80
  %v120 = vmul.f32 %v64, %v119
  %v121 = vrcp.pop %v82
  %v122 = vmul.f32 %v66, %v121
  %v123 = vrcp.pop %v84
  %v124 = vmul.f32 %v68, %v123
  %v125 = vrcp.pop %v86
  %v126 = vmul.f32 %v70, %v125
  %v127 = vrcp.pop %v88
  %v128 = vmul.f32 %v72, %v127
  %v129 = vld [vmem:[%s2] sm:$0xff]
  %v130 = vld [vmem:[%s2 + $0x8] sm:$0xff]
  %v131 = vld [vmem:[%s2 + $0x10] sm:$0xff]
  %v132 = vld [vmem:[%s2 + $0x18] sm:$0xff]
  %v133 = vld [vmem:[%s2 + $0x20] sm:$0xff]
  %v134 = vld [vmem:[%s2 + $0x28] sm:$0xff]
  %v135 = vld [vmem:[%s2 + $0x30] sm:$0xff]
  %v136 = vld [vmem:[%s2 + $0x38] sm:$0xff]
  %v137 = vld [vmem:[%s2 + $0x40] sm:$0xff]
  %v138 = vld [vmem:[%s2 + $0x48] sm:$0xff]
  %v139 = vld [vmem:[%s2 + $0x50] sm:$0xff]
  %v140 = vld [vmem:[%s2 + $0x58] sm:$0xff]
  %v141 = vld [vmem:[%s2 + $0x60] sm:$0xff]
  %v142 = vld [vmem:[%s2 + $0x68] sm:$0xff]
  %v143 = vld [vmem:[%s2 + $0x70] sm:$0xff]
  %v144 = vld [vmem:[%s2 + $0x78] sm:$0xff]
  %145 = vmatprep.subr.mxu0 0.0
  %146 = vmatpush1.msra.mxu0 %v129
  %147 = vmatprep.subr.mxu0 0.0
  %148 = vmatpush1.msra.mxu0 %v130
  %149 = vmatprep.subr.mxu0 0.0
  %150 = vmatpush1.msra.mxu0 %v131
  %151 = vmatprep.subr.mxu0 0.0
  %152 = vmatpush1.msra.mxu0 %v132
  %153 = vmatprep.subr.mxu0 0.0
  %154 = vmatpush1.msra.mxu0 %v133
  %155 = vmatprep.subr.mxu0 0.0
  %156 = vmatpush1.msra.mxu0 %v134
  %157 = vmatprep.subr.mxu0 0.0
  %158 = vmatpush1.msra.mxu0 %v135
  %159 = vmatprep.subr.mxu0 0.0
  %160 = vmatpush1.msra.mxu0 %v136
  %161 = vmatprep.subr.mxu0 0.0
  %162 = vmatpush1.msra.mxu0 %v137
  %163 = vmatprep.subr.mxu0 0.0
  %164 = vmatpush1.msra.mxu0 %v138
  %165 = vmatprep.subr.mxu0 0.0
  %166 = vmatpush1.msra.mxu0 %v139
  %167 = vmatprep.subr.mxu0 0.0
  %168 = vmatpush1.msra.mxu0 %v140
  %169 = vmatprep.subr.mxu0 0.0
  %170 = vmatpush1.msra.mxu0 %v141
  %171 = vmatprep.subr.mxu0 0.0
  %172 = vmatpush1.msra.mxu0 %v142
  %173 = vmatprep.subr.mxu0 0.0
  %174 = vmatpush1.msra.mxu0 %v143
  %175 = vmatprep.subr.mxu0 0.0
  %176 = vmatpush1.msra.mxu0 %v144
  %177 = vmatprep.subr.mxu0 0.0
  %178 = vmatpush1.msra.mxu0 0.0
  %179 = vmatprep.subr.mxu0 0.0
  %180 = vmatpush1.msra.mxu0 0.0
  %181 = vmatprep.subr.mxu0 0.0
  %182 = vmatpush1.msra.mxu0 0.0
  %183 = vmatprep.subr.mxu0 0.0
  %184 = vmatpush1.msra.mxu0 0.0
  %185 = vmatprep.subr.mxu0 0.0
  %186 = vmatpush1.msra.mxu0 0.0
  %187 = vmatprep.subr.mxu0 0.0
  %188 = vmatpush1.msra.mxu0 0.0
  %189 = vmatprep.subr.mxu0 0.0
  %190 = vmatpush1.msra.mxu0 0.0
  %191 = vmatprep.subr.mxu0 0.0
  %192 = vmatpush1.msra.mxu0 0.0
  %193 = vmatprep.subr.mxu0 0.0
  %194 = vmatpush1.msra.mxu0 0.0
  %195 = vmatprep.subr.mxu0 0.0
  %196 = vmatpush1.msra.mxu0 0.0
  %197 = vmatprep.subr.mxu0 0.0
  %198 = vmatpush1.msra.mxu0 0.0
  %199 = vmatprep.subr.mxu0 0.0
  %200 = vmatpush1.msra.mxu0 0.0
  %201 = vmatprep.subr.mxu0 0.0
  %202 = vmatpush1.msra.mxu0 0.0
  %203 = vmatprep.subr.mxu0 0.0
  %204 = vmatpush1.msra.mxu0 0.0
  %205 = vmatprep.subr.mxu0 0.0
  %206 = vmatpush1.msra.mxu0 0.0
  %207 = vmatprep.subr.mxu0 0.0
  %208 = vmatpush1.msra.mxu0 0.0
  %209 = vmatprep.mubr.f32.mxu0 0.0
  %210 = vmatmul.mubr.f32.gmra.mrb[0].mxu0 %v17
  %v211 = vpop.f32.mrb[0].mxu0
  %v212 = vadd.f32 0.0, %v211
  %v213 = vpop.f32.mrb[0].mxu0
  %214 = vmatprep.mubr.f32.mxu0 0.0
  %215 = vmatmul.mubr.f32.gmra.mrb[0].mxu0 %v18
  %v216 = vpop.f32.mrb[0].mxu0
  %v217 = vadd.f32 0.0, %v216
  %v218 = vpop.f32.mrb[0].mxu0
  %219 = vmatprep.mubr.f32.mxu0 0.0
  %220 = vmatmul.mubr.f32.gmra.mrb[0].mxu0 %v19
  %v221 = vpop.f32.mrb[0].mxu0
  %v222 = vadd.f32 0.0, %v221
  %v223 = vpop.f32.mrb[0].mxu0
  %224 = vmatprep.mubr.f32.mxu0 0.0
  %225 = vmatmul.mubr.f32.gmra.mrb[0].mxu0 %v20
  %v226 = vpop.f32.mrb[0].mxu0
  %v227 = vadd.f32 0.0, %v226
  %v228 = vpop.f32.mrb[0].mxu0
  %229 = vmatprep.mubr.f32.mxu0 0.0
  %230 = vmatmul.mubr.f32.gmra.mrb[0].mxu0 %v21
  %v231 = vpop.f32.mrb[0].mxu0
  %v232 = vadd.f32 0.0, %v231
  %v233 = vpop.f32.mrb[0].mxu0
  %234 = vmatprep.mubr.f32.mxu0 0.0
  %235 = vmatmul.mubr.f32.gmra.mrb[0].mxu0 %v22
  %v236 = vpop.f32.mrb[0].mxu0
  %v237 = vadd.f32 0.0, %v236
  %v238 = vpop.f32.mrb[0].mxu0
  %239 = vmatprep.mubr.f32.mxu0 0.0
  %240 = vmatmul.mubr.f32.gmra.mrb[0].mxu0 %v23
  %v241 = vpop.f32.mrb[0].mxu0
  %v242 = vadd.f32 0.0, %v241
  %v243 = vpop.f32.mrb[0].mxu0
  %244 = vmatprep.mubr.f32.mxu0 0.0
  %245 = vmatmul.mubr.f32.gmra.mrb[0].mxu0 %v24
  %v246 = vpop.f32.mrb[0].mxu0
  %v247 = vadd.f32 0.0, %v246
  %v248 = vpop.f32.mrb[0].mxu0
  %249 = vdwg.mxu0
  %v250 = vadd.f32 %v25, %v212
  %v251 = vadd.f32 %v26, %v217
  %v252 = vadd.f32 %v27, %v222
  %v253 = vadd.f32 %v28, %v227
  %v254 = vadd.f32 %v29, %v232
  %v255 = vadd.f32 %v30, %v237
  %v256 = vadd.f32 %v31, %v242
  %v257 = vadd.f32 %v32, %v247
  %258 = vmax.xlane.f32.xlu0 %v250
  %v259 = vpop.xlane.xlu0 %258
  %260 = vmax.xlane.f32.xlu0 %v251
  %v261 = vpop.xlane.xlu0 %260
  %262 = vmax.xlane.f32.xlu0 %v252
  %v263 = vpop.xlane.xlu0 %262
  %264 = vmax.xlane.f32.xlu0 %v253
  %v265 = vpop.xlane.xlu0 %264
  %266 = vmax.xlane.f32.xlu0 %v254
  %v267 = vpop.xlane.xlu0 %266
  %268 = vmax.xlane.f32.xlu0 %v255
  %v269 = vpop.xlane.xlu0 %268
  %270 = vmax.xlane.f32.xlu0 %v256
  %v271 = vpop.xlane.xlu0 %270
  %272 = vmax.xlane.f32.xlu0 %v257
  %v273 = vpop.xlane.xlu0 %272
  %v274 = vsub.f32 %v250, %v259
  %v275 = vsub.f32 %v251, %v261
  %v276 = vsub.f32 %v252, %v263
  %v277 = vsub.f32 %v253, %v265
  %v278 = vsub.f32 %v254, %v267
  %v279 = vsub.f32 %v255, %v269
  %v280 = vsub.f32 %v256, %v271
  %v281 = vsub.f32 %v257, %v273
  %v282 = vmul.f32 %v274, 1.442695
  %v283 = vpow.pop %v282
  %v284 = vmul.f32 %v275, 1.442695
  %v285 = vpow.pop %v284
  %v286 = vmul.f32 %v276, 1.442695
  %v287 = vpow.pop %v286
  %v288 = vmul.f32 %v277, 1.442695
  %v289 = vpow.pop %v288
  %v290 = vmul.f32 %v278, 1.442695
  %v291 = vpow.pop %v290
  %v292 = vmul.f32 %v279, 1.442695
  %v293 = vpow.pop %v292
  %v294 = vmul.f32 %v280, 1.442695
  %v295 = vpow.pop %v294
  %v296 = vmul.f32 %v281, 1.442695
  %v297 = vpow.pop %v296
  %298 = vadd.xlane.f32.xlu0 %v283
  %v299 = vpop.xlane.xlu0 %298
  %300 = vadd.xlane.f32.xlu0 %v285
  %v301 = vpop.xlane.xlu0 %300
  %302 = vadd.xlane.f32.xlu0 %v287
  %v303 = vpop.xlane.xlu0 %302
  %304 = vadd.xlane.f32.xlu0 %v289
  %v305 = vpop.xlane.xlu0 %304
  %306 = vadd.xlane.f32.xlu0 %v291
  %v307 = vpop.xlane.xlu0 %306
  %308 = vadd.xlane.f32.xlu0 %v293
  %v309 = vpop.xlane.xlu0 %308
  %310 = vadd.xlane.f32.xlu0 %v295
  %v311 = vpop.xlane.xlu0 %310
  %312 = vadd.xlane.f32.xlu0 %v297
  %v313 = vpop.xlane.xlu0 %312
  %v314 = vrcp.pop %v299
  %v315 = vrcp.pop %v301
  %v316 = vrcp.pop %v303
  %v317 = vrcp.pop %v305
  %v318 = vrcp.pop %v307
  %v319 = vrcp.pop %v309
  %v320 = vrcp.pop %v311
  %v321 = vrcp.pop %v313
  %v322 = vmul.f32 %v283, %v314
  %v323 = vmul.f32 %v285, %v315
  %v324 = vmul.f32 %v287, %v316
  %v325 = vmul.f32 %v289, %v317
  %v326 = vmul.f32 %v291, %v318
  %v327 = vmul.f32 %v293, %v319
  %v328 = vmul.f32 %v295, %v320
  %v329 = vmul.f32 %v297, %v321
  %v330 = vsub.f32 %v322, %v114
  %v331 = vsub.f32 %v323, %v116
  %v332 = vsub.f32 %v324, %v118
  %v333 = vsub.f32 %v325, %v120
  %v334 = vsub.f32 %v326, %v122
  %v335 = vsub.f32 %v327, %v124
  %v336 = vsub.f32 %v328, %v126
  %v337 = vsub.f32 %v329, %v128
  %v338 = vmul.f32 %v330, 0.015625
  %v339 = vmul.f32 %v331, 0.015625
  %v340 = vmul.f32 %v332, 0.015625
  %v341 = vmul.f32 %v333, 0.015625
  %v342 = vmul.f32 %v334, 0.015625
  %v343 = vmul.f32 %v335, 0.015625
  %v344 = vmul.f32 %v336, 0.015625
  %v345 = vmul.f32 %v337, 0.015625
  %v346 = vld [vmem:[%s3] sm:$0xff]
  %v347 = vld [vmem:[%s3 + $0x8] sm:$0xff]
  %v348 = vld [vmem:[%s3 + $0x10] sm:$0xff]
  %v349 = vld [vmem:[%s3 + $0x18] sm:$0xff]
  %v350 = vld [vmem:[%s3 + $0x20] sm:$0xff]
  %v351 = vld [vmem:[%s3 + $0x28] sm:$0xff]
  %v352 = vld [vmem:[%s3 + $0x30] sm:$0xff]
  %v353 = vld [vmem:[%s3 + $0x38] sm:$0xff]
  %v354 = vld [vmem:[%s3 + $0x40] sm:$0xff]
  %v355 = vld [vmem:[%s3 + $0x48] sm:$0xff]
  %v356 = vld [vmem:[%s3 + $0x50] sm:$0xff]
  %v357 = vld [vmem:[%s3 + $0x58] sm:$0xff]
  %v358 = vld [vmem:[%s3 + $0x60] sm:$0xff]
  %v359 = vld [vmem:[%s3 + $0x68] sm:$0xff]
  %v360 = vld [vmem:[%s3 + $0x70] sm:$0xff]
  %v361 = vld [vmem:[%s3 + $0x78] sm:$0xff]
  %362 = vmatprep.subr.mxu0 0.0
  %363 = vmatpush1.msra.mxu0 %v346
  %364 = vmatprep.subr.mxu0 0.0
  %365 = vmatpush1.msra.mxu0 %v347
  %366 = vmatprep.subr.mxu0 0.0
  %367 = vmatpush1.msra.mxu0 %v348
  %368 = vmatprep.subr.mxu0 0.0
  %369 = vmatpush1.msra.mxu0 %v349
  %370 = vmatprep.subr.mxu0 0.0
  %371 = vmatpush1.msra.mxu0 %v350
  %372 = vmatprep.subr.mxu0 0.0
  %373 = vmatpush1.msra.mxu0 %v351
  %374 = vmatprep.subr.mxu0 0.0
  %375 = vmatpush1.msra.mxu0 %v352
  %376 = vmatprep.subr.mxu0 0.0
  %377 = vmatpush1.msra.mxu0 %v353
  %378 = vmatprep.subr.mxu0 0.0
  %379 = vmatpush1.msra.mxu0 %v354
  %380 = vmatprep.subr.mxu0 0.0
  %381 = vmatpush1.msra.mxu0 %v355
  %382 = vmatprep.subr.mxu0 0.0
  %383 = vmatpush1.msra.mxu0 %v356
  %384 = vmatprep.subr.mxu0 0.0
  %385 = vmatpush1.msra.mxu0 %v357
  %386 = vmatprep.subr.mxu0 0.0
  %387 = vmatpush1.msra.mxu0 %v358
  %388 = vmatprep.subr.mxu0 0.0
  %389 = vmatpush1.msra.mxu0 %v359
  %390 = vmatprep.subr.mxu0 0.0
  %391 = vmatpush1.msra.mxu0 %v360
  %392 = vmatprep.subr.mxu0 0.0
  %393 = vmatpush1.msra.mxu0 %v361
  %394 = vmatprep.subr.mxu0 0.0
  %395 = vmatpush1.msra.mxu0 0.0
  %396 = vmatprep.subr.mxu0 0.0
  %397 = vmatpush1.msra.mxu0 0.0
  %398 = vmatprep.subr.mxu0 0.0
  %399 = vmatpush1.msra.mxu0 0.0
  %400 = vmatprep.subr.mxu0 0.0
  %401 = vmatpush1.msra.mxu0 0.0
  %402 = vmatprep.subr.mxu0 0.0
  %403 = vmatpush1.msra.mxu0 0.0
  %404 = vmatprep.subr.mxu0 0.0
  %405 = vmatpush1.msra.mxu0 0.0
  %406 = vmatprep.subr.mxu0 0.0
  %407 = vmatpush1.msra.mxu0 0.0
  %408 = vmatprep.subr.mxu0 0.0
  %409 = vmatpush1.msra.mxu0 0.0
  %410 = vmatprep.subr.mxu0 0.0
  %411 = vmatpush1.msra.mxu0 0.0
  %412 = vmatprep.subr.mxu0 0.0
  %413 = vmatpush1.msra.mxu0 0.0
  %414 = vmatprep.subr.mxu0 0.0
  %415 = vmatpush1.msra.mxu0 0.0
  %416 = vmatprep.subr.mxu0 0.0
  %417 = vmatpush1.msra.mxu0 0.0
  %418 = vmatprep.subr.mxu0 0.0
  %419 = vmatpush1.msra.mxu0 0.0
  %420 = vmatprep.subr.mxu0 0.0
  %421 = vmatpush1.msra.mxu0 0.0
  %422 = vmatprep.subr.mxu0 0.0
  %423 = vmatpush1.msra.mxu0 0.0
  %424 = vmatprep.subr.mxu0 0.0
  %425 = vmatpush1.msra.mxu0 0.0
  %426 = vmatprep.mubr.f32.mxu0 0.0
  %427 = vmatmul.mubr.f32.gmra.mrb[0].mxu0 %v338
  %v428 = vpop.f32.mrb[0].mxu0
  %v429 = vadd.f32 0.0, %v428
  %v430 = vpop.f32.mrb[0].mxu0
  %431 = vmatprep.mubr.f32.mxu0 0.0
  %432 = vmatmul.mubr.f32.gmra.mrb[0].mxu0 %v339
  %v433 = vpop.f32.mrb[0].mxu0
  %v434 = vadd.f32 0.0, %v433
  %v435 = vpop.f32.mrb[0].mxu0
  %436 = vmatprep.mubr.f32.mxu0 0.0
  %437 = vmatmul.mubr.f32.gmra.mrb[0].mxu0 %v340
  %v438 = vpop.f32.mrb[0].mxu0
  %v439 = vadd.f32 0.0, %v438
  %v440 = vpop.f32.mrb[0].mxu0
  %441 = vmatprep.mubr.f32.mxu0 0.0
  %442 = vmatmul.mubr.f32.gmra.mrb[0].mxu0 %v341
  %v443 = vpop.f32.mrb[0].mxu0
  %v444 = vadd.f32 0.0, %v443
  %v445 = vpop.f32.mrb[0].mxu0
  %446 = vmatprep.mubr.f32.mxu0 0.0
  %447 = vmatmul.mubr.f32.gmra.mrb[0].mxu0 %v342
  %v448 = vpop.f32.mrb[0].mxu0
  %v449 = vadd.f32 0.0, %v448
  %v450 = vpop.f32.mrb[0].mxu0
  %451 = vmatprep.mubr.f32.mxu0 0.0
  %452 = vmatmul.mubr.f32.gmra.mrb[0].mxu0 %v343
  %v453 = vpop.f32.mrb[0].mxu0
  %v454 = vadd.f32 0.0, %v453
  %v455 = vpop.f32.mrb[0].mxu0
  %456 = vmatprep.mubr.f32.mxu0 0.0
  %457 = vmatmul.mubr.f32.gmra.mrb[0].mxu0 %v344
  %v458 = vpop.f32.mrb[0].mxu0
  %v459 = vadd.f32 0.0, %v458
  %v460 = vpop.f32.mrb[0].mxu0
  %461 = vmatprep.mubr.f32.mxu0 0.0
  %462 = vmatmul.mubr.f32.gmra.mrb[0].mxu0 %v345
  %v463 = vpop.f32.mrb[0].mxu0
  %v464 = vadd.f32 0.0, %v463
  %v465 = vpop.f32.mrb[0].mxu0
  %466 = vdwg.mxu0
  %v467 = vmul.f32 %v429, 0.001
  %v468 = vmul.f32 %v434, 0.001
  %v469 = vmul.f32 %v439, 0.001
  %v470 = vmul.f32 %v444, 0.001
  %v471 = vmul.f32 %v449, 0.001
  %v472 = vmul.f32 %v454, 0.001
  %v473 = vmul.f32 %v459, 0.001
  %v474 = vmul.f32 %v464, 0.001
  %v475 = vadd.f32 %v17, %v467
  %v476 = vadd.f32 %v18, %v468
  %v477 = vadd.f32 %v19, %v469
  %v478 = vadd.f32 %v20, %v470
  %v479 = vadd.f32 %v21, %v471
  %v480 = vadd.f32 %v22, %v472
  %v481 = vadd.f32 %v23, %v473
  %v482 = vadd.f32 %v24, %v474
  %v483 = vand.u32 2147483647, %v475
  %v484 = vand.u32 2147483647, %v476
  %v485 = vand.u32 2147483647, %v477
  %v486 = vand.u32 2147483647, %v478
  %v487 = vand.u32 2147483647, %v479
  %v488 = vand.u32 2147483647, %v480
  %v489 = vand.u32 2147483647, %v481
  %v490 = vand.u32 2147483647, %v482
  %491 = vmax.xlane.f32.xlu0 %v483
  %v492 = vpop.xlane.xlu0 %491
  %493 = vmax.xlane.f32.xlu0 %v484
  %v494 = vpop.xlane.xlu0 %493
  %495 = vmax.xlane.f32.xlu0 %v485
  %v496 = vpop.xlane.xlu0 %495
  %497 = vmax.xlane.f32.xlu0 %v486
  %v498 = vpop.xlane.xlu0 %497
  %499 = vmax.xlane.f32.xlu0 %v487
  %v500 = vpop.xlane.xlu0 %499
  %501 = vmax.xlane.f32.xlu0 %v488
  %v502 = vpop.xlane.xlu0 %501
  %503 = vmax.xlane.f32.xlu0 %v489
  %v504 = vpop.xlane.xlu0 %503
  %505 = vmax.xlane.f32.xlu0 %v490
  %v506 = vpop.xlane.xlu0 %505
  %v507 = vadd.f32 %v492, 1e-06
  %v508 = vadd.f32 %v494, 1e-06
  %v509 = vadd.f32 %v496, 1e-06
  %v510 = vadd.f32 %v498, 1e-06
  %v511 = vadd.f32 %v500, 1e-06
  %v512 = vadd.f32 %v502, 1e-06
  %v513 = vadd.f32 %v504, 1e-06
  %v514 = vadd.f32 %v506, 1e-06
  %v515 = vrcp.pop %v507
  %v516 = vrcp.pop %v508
  %v517 = vrcp.pop %v509
  %v518 = vrcp.pop %v510
  %v519 = vrcp.pop %v511
  %v520 = vrcp.pop %v512
  %v521 = vrcp.pop %v513
  %v522 = vrcp.pop %v514
  %v523 = vmul.f32 %v475, %v515
  %v524 = vmul.f32 %v476, %v516
  %v525 = vmul.f32 %v477, %v517
  %v526 = vmul.f32 %v478, %v518
  %v527 = vmul.f32 %v479, %v519
  %v528 = vmul.f32 %v480, %v520
  %v529 = vmul.f32 %v481, %v521
  %v530 = vmul.f32 %v482, %v522
  %531 = vmatprep.subr.mxu0 0.0
  %532 = vmatpush1.msra.mxu0 %v129
  %533 = vmatprep.subr.mxu0 0.0
  %534 = vmatpush1.msra.mxu0 %v130
  %535 = vmatprep.subr.mxu0 0.0
  %536 = vmatpush1.msra.mxu0 %v131
  %537 = vmatprep.subr.mxu0 0.0
  %538 = vmatpush1.msra.mxu0 %v132
  %539 = vmatprep.subr.mxu0 0.0
  %540 = vmatpush1.msra.mxu0 %v133
  %541 = vmatprep.subr.mxu0 0.0
  %542 = vmatpush1.msra.mxu0 %v134
  %543 = vmatprep.subr.mxu0 0.0
  %544 = vmatpush1.msra.mxu0 %v135
  %545 = vmatprep.subr.mxu0 0.0
  %546 = vmatpush1.msra.mxu0 %v136
  %547 = vmatprep.subr.mxu0 0.0
  %548 = vmatpush1.msra.mxu0 %v137
  %549 = vmatprep.subr.mxu0 0.0
  %550 = vmatpush1.msra.mxu0 %v138
  %551 = vmatprep.subr.mxu0 0.0
  %552 = vmatpush1.msra.mxu0 %v139
  %553 = vmatprep.subr.mxu0 0.0
  %554 = vmatpush1.msra.mxu0 %v140
  %555 = vmatprep.subr.mxu0 0.0
  %556 = vmatpush1.msra.mxu0 %v141
  %557 = vmatprep.subr.mxu0 0.0
  %558 = vmatpush1.msra.mxu0 %v142
  %559 = vmatprep.subr.mxu0 0.0
  %560 = vmatpush1.msra.mxu0 %v143
  %561 = vmatprep.subr.mxu0 0.0
  %562 = vmatpush1.msra.mxu0 %v144
  %563 = vmatprep.subr.mxu0 0.0
  %564 = vmatpush1.msra.mxu0 0.0
  %565 = vmatprep.subr.mxu0 0.0
  %566 = vmatpush1.msra.mxu0 0.0
  %567 = vmatprep.subr.mxu0 0.0
  %568 = vmatpush1.msra.mxu0 0.0
  %569 = vmatprep.subr.mxu0 0.0
  %570 = vmatpush1.msra.mxu0 0.0
  %571 = vmatprep.subr.mxu0 0.0
  %572 = vmatpush1.msra.mxu0 0.0
  %573 = vmatprep.subr.mxu0 0.0
  %574 = vmatpush1.msra.mxu0 0.0
  %575 = vmatprep.subr.mxu0 0.0
  %576 = vmatpush1.msra.mxu0 0.0
  %577 = vmatprep.subr.mxu0 0.0
  %578 = vmatpush1.msra.mxu0 0.0
  %579 = vmatprep.subr.mxu0 0.0
  %580 = vmatpush1.msra.mxu0 0.0
  %581 = vmatprep.subr.mxu0 0.0
  %582 = vmatpush1.msra.mxu0 0.0
  %583 = vmatprep.subr.mxu0 0.0
  %584 = vmatpush1.msra.mxu0 0.0
  %585 = vmatprep.subr.mxu0 0.0
  %586 = vmatpush1.msra.mxu0 0.0
  %587 = vmatprep.subr.mxu0 0.0
  %588 = vmatpush1.msra.mxu0 0.0
  %589 = vmatprep.subr.mxu0 0.0
  %590 = vmatpush1.msra.mxu0 0.0
  %591 = vmatprep.subr.mxu0 0.0
  %592 = vmatpush1.msra.mxu0 0.0
  %593 = vmatprep.subr.mxu0 0.0
  %594 = vmatpush1.msra.mxu0 0.0
  %595 = vmatprep.mubr.f32.mxu0 0.0
  %596 = vmatmul.mubr.f32.gmra.mrb[0].mxu0 %v523
  %v597 = vpop.f32.mrb[0].mxu0
  %v598 = vadd.f32 0.0, %v597
  %v599 = vpop.f32.mrb[0].mxu0
  %600 = vmatprep.mubr.f32.mxu0 0.0
  %601 = vmatmul.mubr.f32.gmra.mrb[0].mxu0 %v524
  %v602 = vpop.f32.mrb[0].mxu0
  %v603 = vadd.f32 0.0, %v602
  %v604 = vpop.f32.mrb[0].mxu0
  %605 = vmatprep.mubr.f32.mxu0 0.0
  %606 = vmatmul.mubr.f32.gmra.mrb[0].mxu0 %v525
  %v607 = vpop.f32.mrb[0].mxu0
  %v608 = vadd.f32 0.0, %v607
  %v609 = vpop.f32.mrb[0].mxu0
  %610 = vmatprep.mubr.f32.mxu0 0.0
  %611 = vmatmul.mubr.f32.gmra.mrb[0].mxu0 %v526
  %v612 = vpop.f32.mrb[0].mxu0
  %v613 = vadd.f32 0.0, %v612
  %v614 = vpop.f32.mrb[0].mxu0
  %615 = vmatprep.mubr.f32.mxu0 0.0
  %616 = vmatmul.mubr.f32.gmra.mrb[0].mxu0 %v527
  %v617 = vpop.f32.mrb[0].mxu0
  %v618 = vadd.f32 0.0, %v617
  %v619 = vpop.f32.mrb[0].mxu0
  %620 = vmatprep.mubr.f32.mxu0 0.0
  %621 = vmatmul.mubr.f32.gmra.mrb[0].mxu0 %v528
  %v622 = vpop.f32.mrb[0].mxu0
  %v623 = vadd.f32 0.0, %v622
  %v624 = vpop.f32.mrb[0].mxu0
  %625 = vmatprep.mubr.f32.mxu0 0.0
  %626 = vmatmul.mubr.f32.gmra.mrb[0].mxu0 %v529
  %v627 = vpop.f32.mrb[0].mxu0
  %v628 = vadd.f32 0.0, %v627
  %v629 = vpop.f32.mrb[0].mxu0
  %630 = vmatprep.mubr.f32.mxu0 0.0
  %631 = vmatmul.mubr.f32.gmra.mrb[0].mxu0 %v530
  %v632 = vpop.f32.mrb[0].mxu0
  %v633 = vadd.f32 0.0, %v632
  %v634 = vpop.f32.mrb[0].mxu0
  %635 = vdwg.mxu0
  %v636 = vadd.f32 %v25, %v598
  %v637 = vadd.f32 %v26, %v603
  %v638 = vadd.f32 %v27, %v608
  %v639 = vadd.f32 %v28, %v613
  %v640 = vadd.f32 %v29, %v618
  %v641 = vadd.f32 %v30, %v623
  %v642 = vadd.f32 %v31, %v628
  %v643 = vadd.f32 %v32, %v633
  %644 = vmax.xlane.f32.xlu0 %v636
  %v645 = vpop.xlane.xlu0 %644
  %646 = vmax.xlane.f32.xlu0 %v637
  %v647 = vpop.xlane.xlu0 %646
  %648 = vmax.xlane.f32.xlu0 %v638
  %v649 = vpop.xlane.xlu0 %648
  %650 = vmax.xlane.f32.xlu0 %v639
  %v651 = vpop.xlane.xlu0 %650
  %652 = vmax.xlane.f32.xlu0 %v640
  %v653 = vpop.xlane.xlu0 %652
  %654 = vmax.xlane.f32.xlu0 %v641
  %v655 = vpop.xlane.xlu0 %654
  %656 = vmax.xlane.f32.xlu0 %v642
  %v657 = vpop.xlane.xlu0 %656
  %658 = vmax.xlane.f32.xlu0 %v643
  %v659 = vpop.xlane.xlu0 %658
  %v660 = vsub.f32 %v636, %v645
  %v661 = vsub.f32 %v637, %v647
  %v662 = vsub.f32 %v638, %v649
  %v663 = vsub.f32 %v639, %v651
  %v664 = vsub.f32 %v640, %v653
  %v665 = vsub.f32 %v641, %v655
  %v666 = vsub.f32 %v642, %v657
  %v667 = vsub.f32 %v643, %v659
  %v668 = vmul.f32 %v660, 1.442695
  %v669 = vpow.pop %v668
  %v670 = vmul.f32 %v661, 1.442695
  %v671 = vpow.pop %v670
  %v672 = vmul.f32 %v662, 1.442695
  %v673 = vpow.pop %v672
  %v674 = vmul.f32 %v663, 1.442695
  %v675 = vpow.pop %v674
  %v676 = vmul.f32 %v664, 1.442695
  %v677 = vpow.pop %v676
  %v678 = vmul.f32 %v665, 1.442695
  %v679 = vpow.pop %v678
  %v680 = vmul.f32 %v666, 1.442695
  %v681 = vpow.pop %v680
  %v682 = vmul.f32 %v667, 1.442695
  %v683 = vpow.pop %v682
  %684 = vadd.xlane.f32.xlu0 %v669
  %v685 = vpop.xlane.xlu0 %684
  %686 = vadd.xlane.f32.xlu0 %v671
  %v687 = vpop.xlane.xlu0 %686
  %688 = vadd.xlane.f32.xlu0 %v673
  %v689 = vpop.xlane.xlu0 %688
  %690 = vadd.xlane.f32.xlu0 %v675
  %v691 = vpop.xlane.xlu0 %690
  %692 = vadd.xlane.f32.xlu0 %v677
  %v693 = vpop.xlane.xlu0 %692
  %694 = vadd.xlane.f32.xlu0 %v679
  %v695 = vpop.xlane.xlu0 %694
  %696 = vadd.xlane.f32.xlu0 %v681
  %v697 = vpop.xlane.xlu0 %696
  %698 = vadd.xlane.f32.xlu0 %v683
  %v699 = vpop.xlane.xlu0 %698
  %v700 = vlog2.pop %v685
  %v701 = vmul.f32 %v700, 0.6931472
  %v702 = vlog2.pop %v687
  %v703 = vmul.f32 %v702, 0.6931472
  %v704 = vlog2.pop %v689
  %v705 = vmul.f32 %v704, 0.6931472
  %v706 = vlog2.pop %v691
  %v707 = vmul.f32 %v706, 0.6931472
  %v708 = vlog2.pop %v693
  %v709 = vmul.f32 %v708, 0.6931472
  %v710 = vlog2.pop %v695
  %v711 = vmul.f32 %v710, 0.6931472
  %v712 = vlog2.pop %v697
  %v713 = vmul.f32 %v712, 0.6931472
  %v714 = vlog2.pop %v699
  %v715 = vmul.f32 %v714, 0.6931472
  %v716 = vsub.f32 %v660, %v701
  %v717 = vsub.f32 %v661, %v703
  %v718 = vsub.f32 %v662, %v705
  %v719 = vsub.f32 %v663, %v707
  %v720 = vsub.f32 %v664, %v709
  %v721 = vsub.f32 %v665, %v711
  %v722 = vsub.f32 %v666, %v713
  %v723 = vsub.f32 %v667, %v715
  %v724 = vsub.f32 %v105, %v716
  %v725 = vsub.f32 %v106, %v717
  %v726 = vsub.f32 %v107, %v718
  %v727 = vsub.f32 %v108, %v719
  %v728 = vsub.f32 %v109, %v720
  %v729 = vsub.f32 %v110, %v721
  %v730 = vsub.f32 %v111, %v722
  %v731 = vsub.f32 %v112, %v723
  %v732 = vmul.f32 %v114, %v724
  %v733 = vmul.f32 %v116, %v725
  %v734 = vmul.f32 %v118, %v726
  %v735 = vmul.f32 %v120, %v727
  %v736 = vmul.f32 %v122, %v728
  %v737 = vmul.f32 %v124, %v729
  %v738 = vmul.f32 %v126, %v730
  %v739 = vmul.f32 %v128, %v731
  %740 = vadd.xlane.f32.xlu0 %v732
  %v741 = vpop.xlane.xlu0 %740
  %742 = vadd.xlane.f32.xlu0 %v733
  %v743 = vpop.xlane.xlu0 %742
  %744 = vadd.xlane.f32.xlu0 %v734
  %v745 = vpop.xlane.xlu0 %744
  %746 = vadd.xlane.f32.xlu0 %v735
  %v747 = vpop.xlane.xlu0 %746
  %748 = vadd.xlane.f32.xlu0 %v736
  %v749 = vpop.xlane.xlu0 %748
  %750 = vadd.xlane.f32.xlu0 %v737
  %v751 = vpop.xlane.xlu0 %750
  %752 = vadd.xlane.f32.xlu0 %v738
  %v753 = vpop.xlane.xlu0 %752
  %754 = vadd.xlane.f32.xlu0 %v739
  %v755 = vpop.xlane.xlu0 %754
  %v756 = vadd.f32 %v741, %v743
  %v757 = vadd.f32 %v756, %v745
  %v758 = vadd.f32 %v757, %v747
  %v759 = vadd.f32 %v758, %v749
  %v760 = vadd.f32 %v759, %v751
  %v761 = vadd.f32 %v760, %v753
  %v762 = vadd.f32 %v761, %v755
  %v763 = vrot.slane %v762, 4
  %v764 = vadd.f32 %v762, %v763
  %v765 = vrot.slane %v764, 2
  %v766 = vadd.f32 %v764, %v765
  %v767 = vrot.slane %v766, 1
  %v768 = vadd.f32 %v766, %v767
  %v769 = vmul.f32 %v768, 0.015625
  %770 = vst [vmem:[%s4] sm:$0xff] %v769
  // Predicated region
  $region18: #{smart_loss.1} parent=0 // pred_check
    _
  $region19: #{smart_loss.1} parent=0 // pred_check_branch
    %772 = sbr.rel (0) target = $region21
  $region20: #{smart_loss.1} parent=0 // pred_region
    _
  $region21: #{smart_loss.1} parent=0 // pred_fallthru
    _
  // Predicated region
  $region22: #{smart_loss.1} parent=0 // pred_check
    _
  $region23: #{smart_loss.1} parent=0 // pred_check_branch
    %774 = sbr.rel (0) target = $region25
  $region24: #{smart_loss.1} parent=0 // pred_region
    _
  $region25: #{smart_loss.1} parent=0 // pred_fallthru
    _

</llo_original>
